<compile_context>
chip_gen: v5e
topology: v5e:2x2
jax: 0.10.0
libtpu: 0.0.40
codegen_flags: <defaults>
</compile_context>

<pallas_src>
import functools

import jax
import jax.numpy as jnp
from jax.experimental import pallas as pl
from jax.experimental.pallas import tpu as pltpu


def _round_up(x, m):
    return (x + m - 1) // m * m


@functools.lru_cache(maxsize=None)
def _vmem_limit():
    """Per-chip scoped-VMEM budget: generous on 128 MiB parts, safe on v7x (64 MiB)."""
    try:
        cap = int(pltpu.get_tpu_info().vmem_capacity_bytes)
    except Exception:
        cap = 64 * 1024 * 1024
    return int(min(64 * 1024 * 1024, cap // 2))


# ----------------------------------------------------------------------------
# Tiled matmul with fused epilogue: (M, K) @ (K, N) + b [+ add] -> (M, N)
# ----------------------------------------------------------------------------
def _mm_kernel(*refs, has_add):
    x_ref, w_ref, b_ref = refs[:3]
    p = 3
    add_ref = refs[p] if has_add else None
    p += 1 if has_add else 0
    o_ref, acc_ref = refs[p], refs[p + 1]

    k = pl.program_id(2)

    @pl.when(k == 0)
    def _():
        acc_ref[...] = jnp.zeros_like(acc_ref)

    acc_ref[...] += jnp.dot(x_ref[...], w_ref[...],
                            preferred_element_type=jnp.float32)

    @pl.when(k == pl.num_programs(2) - 1)
    def _():
        r = acc_ref[...] + b_ref[...]
        if has_add:
            r = r + add_ref[...].astype(jnp.float32)   # bf16 residual read
        o_ref[...] = r.astype(o_ref.dtype)


def matmul_fused(x, w, b, add=None, *, out_dtype=jnp.bfloat16,
                 compute_dtype=jnp.bfloat16):
    """(M, K) @ (K, N) + b [+ add] in f32 accumulation; batch pre-flattened into M."""
    M, K = x.shape
    N = w.shape[1]

    tm = min(512, _round_up(M, 8))
    tn = min(256, _round_up(N, 128))
    tk = min(512, _round_up(K, 128))
    Mp, Np, Kp = _round_up(M, tm), _round_up(N, tn), _round_up(K, tk)

    xp = x.astype(compute_dtype)
    if (Mp, Kp) != (M, K):
        xp = jnp.pad(xp, ((0, Mp - M), (0, Kp - K)))
    wp = w.astype(compute_dtype)
    if (Kp, Np) != (K, N):
        wp = jnp.pad(wp, ((0, Kp - K), (0, Np - N)))
    bp = jnp.pad(b.astype(jnp.float32), (0, Np - N)).reshape(1, Np)

    ins = [xp, wp, bp]
    in_specs = [
        pl.BlockSpec((tm, tk), lambda i, j, k: (i, k)),
        pl.BlockSpec((tk, tn), lambda i, j, k: (k, j)),
        pl.BlockSpec((1, tn), lambda i, j, k: (0, j)),
    ]
    has_add = add is not None
    if has_add:
        ap = add.astype(compute_dtype)                 # residual read in bf16
        if (Mp, Np) != (M, N):
            ap = jnp.pad(ap, ((0, Mp - M), (0, Np - N)))
        ins.append(ap)
        in_specs.append(pl.BlockSpec((tm, tn), lambda i, j, k: (i, j)))

    kernel = functools.partial(_mm_kernel, has_add=has_add)
    bytes_accessed = (xp.size * xp.dtype.itemsize + wp.size * wp.dtype.itemsize
                      + Mp * Np * jnp.dtype(out_dtype).itemsize
                      + (ap.size * ap.dtype.itemsize if has_add else 0))
    out = pl.pallas_call(
        kernel,
        out_shape=jax.ShapeDtypeStruct((Mp, Np), out_dtype),
        grid=(Mp // tm, Np // tn, Kp // tk),
        in_specs=in_specs,
        out_specs=pl.BlockSpec((tm, tn), lambda i, j, k: (i, j)),
        scratch_shapes=[pltpu.VMEM((tm, tn), jnp.float32)],
        compiler_params=pltpu.CompilerParams(
            dimension_semantics=("parallel", "parallel", "arbitrary"),
            vmem_limit_bytes=_vmem_limit()),
        cost_estimate=pl.CostEstimate(flops=int(2 * Mp * Np * Kp),
                                      transcendentals=0,
                                      bytes_accessed=int(bytes_accessed)),
    )(*ins)
    if (Mp, Np) != (M, N):
        out = out[:M, :N]
    return out


# ----------------------------------------------------------------------------
# Direct 3x3x3 conv (stride 1, pad 1): 27 shifted-window taps accumulated in-kernel,
# with optional fused per-batch channel bias (t_emb) and fused 1x1 residual conv.
# ----------------------------------------------------------------------------
def _conv3x3_kernel(*refs, D, H, W, has_cb, has_res):
    x_ref, w_ref, b_ref = refs[:3]
    p = 3
    cb_ref = refs[p] if has_cb else None
    p += 1 if has_cb else 0
    res_ref = refs[p] if has_res else None
    rw_ref = refs[p + 1] if has_res else None
    p += 2 if has_res else 0
    o_ref = refs[p]

    N = D * H * W
    Cout = o_ref.shape[-1]
    acc = jnp.zeros((N, Cout), jnp.float32)
    t = 0
    for kd in range(3):
        for kh in range(3):
            for kw in range(3):
                # x_ref is f32 and W % 8 == 0, so this collapse is a layout no-op.
                win = x_ref[kd:kd + D, kh:kh + H, kw:kw + W, :]
                win = win.reshape(N, win.shape[-1]).astype(jnp.bfloat16)
                acc = acc + jnp.dot(win, w_ref[t],
                                    preferred_element_type=jnp.float32)
                t += 1
    if has_res:
        # Fused 1x1 residual conv: one extra MXU tap inside the same kernel.
        acc = acc + jnp.dot(res_ref[0], rw_ref[...],
                            preferred_element_type=jnp.float32)
    r = acc + b_ref[...]
    if has_cb:
        r = r + cb_ref[0].astype(jnp.float32)          # (1, Cout) broadcast over rows
    o_ref[0] = r.astype(o_ref.dtype)


def conv3d_3x3(x, w_taps, bias, cbias=None, res=None, rc_w=None, *,
               out_dtype=jnp.bfloat16):
    """x: (B, D, H, W, Cin) f32; w_taps: (27, Cin, Cout); bias: (Cout,).
    cbias: (B, Cout) per-batch channel bias.  res/rc_w: fused 1x1 residual conv.
    Returns (B, D*H*W, Cout)."""
    B, D, H, W, Cin = x.shape
    N = D * H * W
    Cout = bias.shape[0]

    if W % 8 != 0:
        # Fallback for awkward widths: im2col + fused matmul (kept for robustness).
        cols, _ = im2col_3d(x.astype(jnp.bfloat16), 3, 1)
        y = matmul_fused(cols.reshape(B * N, 27 * Cin),
                         w_taps.reshape(27 * Cin, Cout), bias,
                         out_dtype=jnp.float32).reshape(B, N, Cout)
        if cbias is not None:
            y = y + cbias[:, None, :].astype(jnp.float32)
        if res is not None:
            y = y + jnp.einsum("bnc,cd->bnd", res.astype(jnp.float32),
                               rc_w.astype(jnp.float32))
        return y.astype(out_dtype)

    Dp, Hp, Wp = D + 2, H + 2, W + 2
    xp = jnp.pad(x.astype(jnp.float32),
                 ((0, 0), (1, 1), (1, 1), (1, 1), (0, 0)))
    xp = xp.reshape(B * Dp, Hp, Wp, Cin)               # keep blocks rank-4

    ins = [xp, w_taps.astype(jnp.bfloat16),
           bias.astype(jnp.float32).reshape(1, Cout)]
    in_specs = [
        pl.BlockSpec((Dp, Hp, Wp, Cin), lambda b: (b, 0, 0, 0)),
        pl.BlockSpec((27, Cin, Cout), lambda b: (0, 0, 0)),
        pl.BlockSpec((1, Cout), lambda b: (0, 0)),
    ]
    has_cb = cbias is not None
    has_res = res is not None
    if has_cb:
        ins.append(cbias.astype(jnp.float32).reshape(B, 1, Cout))
        in_specs.append(pl.BlockSpec((1, 1, Cout), lambda b: (b, 0, 0)))
    if has_res:
        Cr = res.shape[-1]
        ins.append(res.astype(jnp.bfloat16))
        in_specs.append(pl.BlockSpec((1, N, Cr), lambda b: (b, 0, 0)))
        ins.append(rc_w.astype(jnp.bfloat16))
        in_specs.append(pl.BlockSpec((Cr, Cout), lambda b: (0, 0)))

    kernel = functools.partial(_conv3x3_kernel, D=D, H=H, W=W,
                               has_cb=has_cb, has_res=has_res)
    flops = 2 * B * N * Cout * (27 * Cin + (res.shape[-1] if has_res else 0))
    bytes_accessed = (xp.size * xp.dtype.itemsize
                      + B * N * Cout * jnp.dtype(out_dtype).itemsize
                      + (res.size * 2 if has_res else 0))
    # TODO(synk): depth-tile the input block with a 1-slab halo for large volumes.
    return pl.pallas_call(
        kernel,
        out_shape=jax.ShapeDtypeStruct((B, N, Cout), out_dtype),
        grid=(B,),
        in_specs=in_specs,
        out_specs=pl.BlockSpec((1, N, Cout), lambda b: (b, 0, 0)),
        compiler_params=pltpu.CompilerParams(
            dimension_semantics=("parallel",),
            vmem_limit_bytes=_vmem_limit()),
        cost_estimate=pl.CostEstimate(flops=int(flops), transcendentals=0,
                                      bytes_accessed=int(bytes_accessed)),
    )(*ins)


# ----------------------------------------------------------------------------
# GroupNorm (+ optional fused SiLU): centered two-pass stats, gamma/beta folded
# into a per-channel scale/shift.
# ----------------------------------------------------------------------------
def _groupnorm_kernel(x_ref, g_ref, b_ref, o_ref, *, num_groups, eps, apply_silu):
    x = x_ref[0].astype(jnp.float32)                   # (N, C)
    N, C = x.shape
    cg = C // num_groups
    cnt = float(N * cg)
    lane = jax.lax.broadcasted_iota(jnp.int32, (1, C), 1)

    col_sum = jnp.sum(x, axis=0, keepdims=True)        # (1, C)
    mean_c = jnp.zeros((1, C), jnp.float32)
    for g in range(num_groups):
        mask = (lane >= g * cg) & (lane < (g + 1) * cg)
        mean_c = jnp.where(mask, jnp.sum(jnp.where(mask, col_sum, 0.0)) / cnt,
                           mean_c)

    xc = x - mean_c                                    # centered second pass
    col_sq = jnp.sum(xc * xc, axis=0, keepdims=True)
    rstd_c = jnp.zeros((1, C), jnp.float32)
    for g in range(num_groups):
        mask = (lane >= g * cg) & (lane < (g + 1) * cg)
        var = jnp.sum(jnp.where(mask, col_sq, 0.0)) / cnt
        rstd_c = jnp.where(mask, jax.lax.rsqrt(var + eps), rstd_c)

    scale = rstd_c * g_ref[...]                        # y = x*scale + shift
    shift = b_ref[...] - mean_c * scale
    y = x * scale + shift
    if apply_silu:
        y = y * jax.nn.sigmoid(y)
    o_ref[0] = y.astype(o_ref.dtype)


def group_norm(x, gamma, beta, num_groups, apply_silu, eps=1e-5,
               out_dtype=jnp.bfloat16):
    """x: (B, N, C) -> GroupNorm over (group channels, N) per batch, opt. SiLU."""
    B, N, C = x.shape
    kern = functools.partial(_groupnorm_kernel, num_groups=num_groups,
                             eps=eps, apply_silu=apply_silu)
    # TODO(synk): tile the spatial axis (grid=(B, N/tn) + scratch partial sums) so
    #             production-size blocks fit v7x's 64 MiB VMEM.
    return pl.pallas_call(
        kern,
        out_shape=jax.ShapeDtypeStruct((B, N, C), out_dtype),
        grid=(B,),
        in_specs=[
            pl.BlockSpec((1, N, C), lambda b: (b, 0, 0)),
            pl.BlockSpec((1, C), lambda b: (0, 0)),
            pl.BlockSpec((1, C), lambda b: (0, 0)),
        ],
        out_specs=pl.BlockSpec((1, N, C), lambda b: (b, 0, 0)),
        compiler_params=pltpu.CompilerParams(
            dimension_semantics=("parallel",),
            vmem_limit_bytes=_vmem_limit()),
    )(x, gamma.reshape(1, C), beta.reshape(1, C))


# ----------------------------------------------------------------------------
# Lane-dense multi-head attention core: grid over batch, heads looped in-kernel
# with static lane slices; softmax denominator via EUP reciprocal.
# ----------------------------------------------------------------------------
def _attn_kernel(qkv_ref, o_ref, *, num_heads, head_dim, scale):
    C = num_heads * head_dim
    for h in range(num_heads):
        q = qkv_ref[0, :, h * head_dim:(h + 1) * head_dim]
        k = qkv_ref[0, :, C + h * head_dim:C + (h + 1) * head_dim]
        v = qkv_ref[0, :, 2 * C + h * head_dim:2 * C + (h + 1) * head_dim]
        s = jax.lax.dot_general(q, k, (((1,), (1,)), ((), ())),
                                preferred_element_type=jnp.float32) * scale
        s = s - jnp.max(s, axis=-1, keepdims=True)
        p = jnp.exp(s)
        p = p * pl.reciprocal(jnp.sum(p, axis=-1, keepdims=True), approx=True)
        o = jnp.dot(p.astype(v.dtype), v, preferred_element_type=jnp.float32)
        o_ref[0, :, h * head_dim:(h + 1) * head_dim] = o.astype(o_ref.dtype)


def attention_core(qkv, num_heads):
    """qkv: (B, S, 3C) channels-last -> (B, S, C) bf16."""
    B, S, C3 = qkv.shape
    C = C3 // 3
    hd = C // num_heads
    kern = functools.partial(_attn_kernel, num_heads=num_heads, head_dim=hd,
                             scale=1.0 / (hd ** 0.5))
    # TODO(synk): flash-style KV tiling (m/l/acc scratch over a KV grid axis) for long
    #             sequences; full SxS scores are fine at the S = D*H*W sizes used here.
    return pl.pallas_call(
        kern,
        out_shape=jax.ShapeDtypeStruct((B, S, C), jnp.bfloat16),
        grid=(B,),
        in_specs=[pl.BlockSpec((1, S, C3), lambda b: (b, 0, 0))],
        out_specs=pl.BlockSpec((1, S, C), lambda b: (b, 0, 0)),
        compiler_params=pltpu.CompilerParams(
            dimension_semantics=("parallel",),
            vmem_limit_bytes=_vmem_limit()),
    )(qkv.astype(jnp.bfloat16))


# ----------------------------------------------------------------------------
# JAX glue: patch extraction / weight packing
# ----------------------------------------------------------------------------
def im2col_3d(x, ksize, pad):
    """x: (B, D, H, W, C) -> (B, Do*Ho*Wo, k^3*C), column order (kd, kh, kw, cin)."""
    B, D, H, W, C = x.shape
    Do = D + 2 * pad - ksize + 1
    Ho = H + 2 * pad - ksize + 1
    Wo = W + 2 * pad - ksize + 1
    xp = jnp.pad(x, ((0, 0), (pad, pad), (pad, pad), (pad, pad), (0, 0)))
    patches = []
    for kd in range(ksize):
        for kh in range(ksize):
            for kw in range(ksize):
                patches.append(xp[:, kd:kd + Do, kh:kh + Ho, kw:kw + Wo, :])
    cols = jnp.concatenate(patches, axis=-1)
    return cols.reshape(B, Do * Ho * Wo, ksize ** 3 * C), (Do, Ho, Wo)


def conv3d_weight_to_taps(w):
    """w: (Cout, Cin, k, k, k) -> (k^3, Cin, Cout) in (kd, kh, kw) tap order."""
    k = w.shape[-1]
    return jnp.transpose(w, (2, 3, 4, 1, 0)).reshape(k ** 3, w.shape[1], w.shape[0])


def convtranspose3d_subpixel_weight(w_ct):
    """ConvTranspose3d(k=4, s=2, p=1) weight (Cin, Cout, 4,4,4) -> (27*Cin, 8*Cout).

    Output column order (rd, rh, rw, cout).  Paired with a k=3/pad=1 im2col on the
    LOW-res grid: output parity r at low-res position m uses input taps
      r=0: i=m-1 (kernel idx 3), i=m (kernel idx 1)
      r=1: i=m (kernel idx 2), i=m+1 (kernel idx 0)
    """
    Cin, Cout = w_ct.shape[0], w_ct.shape[1]
    kd_map = {(0, 0): 3, (0, 1): 1, (1, 1): 2, (1, 2): 0}   # (parity, tap) -> k idx
    W = jnp.zeros((3, 3, 3, Cin, 2, 2, 2, Cout), w_ct.dtype)
    for rd in (0, 1):
        for rh in (0, 1):
            for rw in (0, 1):
                for td in (0, 1, 2):
                    if (rd, td) not in kd_map:
                        continue
                    for th in (0, 1, 2):
                        if (rh, th) not in kd_map:
                            continue
                        for tw in (0, 1, 2):
                            if (rw, tw) not in kd_map:
                                continue
                            kd, kh, kw = (kd_map[(rd, td)], kd_map[(rh, th)],
                                          kd_map[(rw, tw)])
                            W = W.at[td, th, tw, :, rd, rh, rw, :].set(
                                w_ct[:, :, kd, kh, kw])
    return W.reshape(27 * Cin, 8 * Cout)


# ----------------------------------------------------------------------------
# Parameters (deterministic synthetic init; PyTorch-shaped, then packed)
# ----------------------------------------------------------------------------
def init_params(key, in_ch, out_ch, t_dim, num_layers, up_sample):
    keys = iter(jax.random.split(key, 256))

    def nrm(shape, scale=0.05):
        return scale * jax.random.normal(next(keys), shape, jnp.float32)

    p = {k: [] for k in
         ["gn1_w", "gn1_b", "conv1_w", "conv1_b", "t_w", "t_b",
          "gn2_w", "gn2_b", "conv2_w", "conv2_b", "rc_w", "rc_b",
          "an_w", "an_b", "wqkv", "bqkv", "wo", "bo"]}

    if up_sample:
        w_ct = nrm((in_ch, in_ch, 4, 4, 4))                  # ConvTranspose3d weight
        p["up_w"] = convtranspose3d_subpixel_weight(w_ct)
        p["up_b"] = jnp.tile(nrm((in_ch,)), 8)               # per-parity bias copies

    for i in range(num_layers):
        cin = in_ch if i == 0 else out_ch
        p["gn1_w"].append(jnp.ones((cin,), jnp.float32))
        p["gn1_b"].append(jnp.zeros((cin,), jnp.float32))
        p["conv1_w"].append(conv3d_weight_to_taps(nrm((out_ch, cin, 3, 3, 3))))
        p["conv1_b"].append(nrm((out_ch,)))
        if t_dim is not None:
            p["t_w"].append(nrm((out_ch, t_dim)).T)          # Linear: y = x @ W.T + b
            p["t_b"].append(nrm((out_ch,)))
        p["gn2_w"].append(jnp.ones((out_ch,), jnp.float32))
        p["gn2_b"].append(jnp.zeros((out_ch,), jnp.float32))
        p["conv2_w"].append(conv3d_weight_to_taps(nrm((out_ch, out_ch, 3, 3, 3))))
        p["conv2_b"].append(nrm((out_ch,)))
        p["rc_w"].append(nrm((out_ch, cin, 1, 1, 1)).reshape(out_ch, cin).T)
        p["rc_b"].append(nrm((out_ch,)))
        # attention
        p["an_w"].append(jnp.ones((out_ch,), jnp.float32))
        p["an_b"].append(jnp.zeros((out_ch,), jnp.float32))
        ipw = nrm((3 * out_ch, out_ch))                      # in_proj_weight (3C, C)
        ipb = nrm((3 * out_ch,))
        p["wqkv"].append(ipw.T)                              # x @ ipw.T -> [q | k | v]
        p["bqkv"].append(ipb)
        p["wo"].append(nrm((out_ch, out_ch)).T)              # out_proj
        p["bo"].append(nrm((out_ch,)))
    return p


# ----------------------------------------------------------------------------
# Forward pass (mirrors UpBlock.forward)
# ----------------------------------------------------------------------------
def up_block_forward(params, x, out_down=None, t_emb=None, *,
                     num_layers, norm_channels, num_heads,
                     up_sample, attn, t_emb_dim):
    x = jnp.transpose(x, (0, 2, 3, 4, 1))                    # NCDHW -> NDHWC

    if up_sample:
        # ConvTranspose3d(k=4, s=2, p=1) via sub-pixel decomposition: one matmul on
        # the LOW-res grid produces all 8 output parities (no zero-insert waste).
        B, D, H, W, Cin = x.shape
        cols, _ = im2col_3d(x.astype(jnp.bfloat16), 3, 1)    # (B, DHW, 27*Cin)
        cu = params["up_b"].shape[0] // 8
        y = matmul_fused(cols.reshape(B * D * H * W, 27 * Cin),
                         params["up_w"], params["up_b"], out_dtype=jnp.bfloat16)
        y = y.reshape(B, D, H, W, 2, 2, 2, cu)
        x = jnp.transpose(y, (0, 1, 4, 2, 5, 3, 6, 7)).reshape(
            B, 2 * D, 2 * H, 2 * W, cu)

    if out_down is not None:
        out_down = jnp.transpose(out_down, (0, 2, 3, 4, 1))
        x = jnp.concatenate([x, out_down.astype(x.dtype)], axis=-1)

    out = x.astype(jnp.bfloat16)
    for i in range(num_layers):
        B, D, H, W, C = out.shape
        N = D * H * W
        cout = params["conv1_b"][i].shape[0]
        resnet_input = out.reshape(B, N, C)                  # bf16

        # resnet_conv_first: GroupNorm + SiLU + Conv3d(3x3x3, pad=1); t_emb fused in.
        h = group_norm(resnet_input, params["gn1_w"][i], params["gn1_b"][i],
                       norm_channels, apply_silu=True, out_dtype=jnp.float32)
        cbias = None
        if t_emb_dim is not None:
            # TODO(synk): PyTorch source broadcasts t_emb_proj[:, :, None, None]
            # (2D-style) against a 5D tensor which cannot broadcast; we implement the
            # intended per-channel broadcast.
            t_act = jax.nn.silu(t_emb.astype(jnp.float32))
            cbias = t_act @ params["t_w"][i] + params["t_b"][i]   # tiny GEMM in XLA
        h = conv3d_3x3(h.reshape(B, D, H, W, C), params["conv1_w"][i],
                       params["conv1_b"][i], cbias=cbias)    # (B, N, cout) bf16

        # resnet_conv_second: GroupNorm + SiLU + Conv3d; the 1x1 residual conv is
        # fused into the same kernel (rc_b folded into the bias).
        h = group_norm(h, params["gn2_w"][i], params["gn2_b"][i],
                       norm_channels, apply_silu=True, out_dtype=jnp.float32)
        out2 = conv3d_3x3(h.reshape(B, D, H, W, cout), params["conv2_w"][i],
                          params["conv2_b"][i] + params["rc_b"][i],
                          res=resnet_input, rc_w=params["rc_w"][i])

        if attn:
            xn = group_norm(out2, params["an_w"][i], params["an_b"][i],
                            norm_channels, apply_silu=False, out_dtype=jnp.bfloat16)
            qkv = matmul_fused(xn.reshape(B * N, cout), params["wqkv"][i],
                               params["bqkv"][i], out_dtype=jnp.bfloat16)
            av = attention_core(qkv.reshape(B, N, 3 * cout), num_heads)
            # out-projection with the attention residual fused into the epilogue.
            out2 = matmul_fused(av.reshape(B * N, cout), params["wo"][i],
                                params["bo"][i], add=out2.reshape(B * N, cout),
                                out_dtype=jnp.bfloat16).reshape(B, N, cout)

        out = out2.reshape(B, D, H, W, cout)

    return jnp.transpose(out.astype(jnp.float32), (0, 4, 1, 2, 3))  # -> NCDHW


# ----------------------------------------------------------------------------
if __name__ == "__main__":
    B = 2
    in_ch, out_ch = 8, 16
    D = H = W = 4
    t_dim = 16
    norm_ch = 4
    num_heads = 4
    num_layers = 2
    up_sample = True
    attn = True

    key = jax.random.PRNGKey(0)
    kx, kt, kp = jax.random.split(key, 3)
    x = jax.random.normal(kx, (B, in_ch, D, H, W), jnp.float32)       # NCDHW
    t_emb = jax.random.normal(kt, (B, t_dim), jnp.float32)
    params = init_params(kp, in_ch, out_ch, t_dim, num_layers, up_sample)

    out = up_block_forward(params, x, out_down=None, t_emb=t_emb,
                           num_layers=num_layers, norm_channels=norm_ch,
                           num_heads=num_heads, up_sample=up_sample,
                           attn=attn, t_emb_dim=t_dim)
    out = jax.block_until_ready(out)
    assert out.shape == (B, out_ch, 2 * D, 2 * H, 2 * W), out.shape
    assert bool(jnp.all(jnp.isfinite(out)))
    print("KERNEL_OK")
</pallas_src>

<mosaic_0001>
module attributes {stable_mosaic.version = 11 : i64} {
  func.func @_mm_kernel(%arg0: i32, %arg1: i32, %arg2: i32, %arg3: memref<128x256xbf16, #tpu.memory_space<vmem>>, %arg4: memref<256x128xbf16, #tpu.memory_space<vmem>>, %arg5: memref<1x128xf32, #tpu.memory_space<vmem>>, %arg6: memref<128x128xbf16, #tpu.memory_space<vmem>>, %arg7: memref<128x128xf32, #tpu.memory_space<vmem>>) attributes {dimension_semantics = [#tpu.dimension_semantics<parallel>, #tpu.dimension_semantics<parallel>, #tpu.dimension_semantics<arbitrary>], iteration_bounds = array<i64: 1, 1, 1>, scalar_prefetch = 0 : i64, scratch_operands = 1 : i64, tpu.core_type = #tpu.core_type<tc>, window_params = [{transform_indices = @transform_0, window_bounds = array<i64: 128, 256>}, {transform_indices = @transform_1, window_bounds = array<i64: 256, 128>}, {transform_indices = @transform_2, window_bounds = array<i64: 1, 128>}, {transform_indices = @transform_3, window_bounds = array<i64: 128, 128>}]} {
    %c0_i32 = arith.constant 0 : i32
    %0 = arith.cmpi eq, %arg2, %c0_i32 : i32
    %1 = arith.extui %0 : i1 to i32
    %c0_i32_0 = arith.constant 0 : i32
    %2 = arith.cmpi ne, %1, %c0_i32_0 : i32
    scf.if %2 {
      %cst_10 = arith.constant 0.000000e+00 : f32
      %12 = vector.broadcast %cst_10 : f32 to vector<128x128xf32>
      %c0_11 = arith.constant 0 : index
      %c0_12 = arith.constant 0 : index
      %13 = vector.load %arg7[%c0_11, %c0_12] : memref<128x128xf32, #tpu.memory_space<vmem>>, vector<128x128xf32>
      tpu.vector_store %arg7[%c0_11, %c0_12], %12 {strides = array<i32>} : memref<128x128xf32, #tpu.memory_space<vmem>>, vector<128x128xf32>,
    } else {
    }
    %c0 = arith.constant 0 : index
    %c0_1 = arith.constant 0 : index
    %3 = vector.load %arg7[%c0, %c0_1] : memref<128x128xf32, #tpu.memory_space<vmem>>, vector<128x128xf32>
    %c0_2 = arith.constant 0 : index
    %c0_3 = arith.constant 0 : index
    %4 = vector.load %arg3[%c0_2, %c0_3] : memref<128x256xbf16, #tpu.memory_space<vmem>>, vector<128x256xbf16>
    %c0_4 = arith.constant 0 : index
    %c0_5 = arith.constant 0 : index
    %5 = vector.load %arg4[%c0_4, %c0_5] : memref<256x128xbf16, #tpu.memory_space<vmem>>, vector<256x128xbf16>
    %cst = arith.constant dense<0.000000e+00> : vector<128x128xf32>
    %6 = tpu.matmul %4, %5, %cst {dimension_numbers = #tpu.dot_dimension_numbers<[1], [0], [0], [1], [0, 0, 1, 1], [], []>} : vector<128x256xbf16>, vector<256x128xbf16>, vector<128x128xf32> -> vector<128x128xf32>
    %7 = arith.addf %3, %6 : vector<128x128xf32>
    %c0_6 = arith.constant 0 : index
    %c0_7 = arith.constant 0 : index
    %8 = vector.load %arg7[%c0_6, %c0_7] : memref<128x128xf32, #tpu.memory_space<vmem>>, vector<128x128xf32>
    tpu.vector_store %arg7[%c0_6, %c0_7], %7 {strides = array<i32>} : memref<128x128xf32, #tpu.memory_space<vmem>>, vector<128x128xf32>,
    %c0_i32_8 = arith.constant 0 : i32
    %9 = arith.cmpi eq, %arg2, %c0_i32_8 : i32
    %10 = arith.extui %9 : i1 to i32
    %c0_i32_9 = arith.constant 0 : i32
    %11 = arith.cmpi ne, %10, %c0_i32_9 : i32
    scf.if %11 {
      %c0_10 = arith.constant 0 : index
      %c0_11 = arith.constant 0 : index
      %12 = vector.load %arg7[%c0_10, %c0_11] : memref<128x128xf32, #tpu.memory_space<vmem>>, vector<128x128xf32>
      %c0_12 = arith.constant 0 : index
      %c0_13 = arith.constant 0 : index
      %13 = vector.load %arg5[%c0_12, %c0_13] : memref<1x128xf32, #tpu.memory_space<vmem>>, vector<1x128xf32>
      %14 = vector.broadcast %13 : vector<1x128xf32> to vector<128x128xf32>
      %15 = arith.addf %12, %14 : vector<128x128xf32>
      %16 = arith.truncf %15 : vector<128x128xf32> to vector<128x128xbf16>
      %c0_14 = arith.constant 0 : index
      %c0_15 = arith.constant 0 : index
      %17 = vector.load %arg6[%c0_14, %c0_15] : memref<128x128xbf16, #tpu.memory_space<vmem>>, vector<128x128xbf16>
      tpu.vector_store %arg6[%c0_14, %c0_15], %16 {strides = array<i32>} : memref<128x128xbf16, #tpu.memory_space<vmem>>, vector<128x128xbf16>,
    } else {
    }
    return
  }
  func.func @transform_0(%arg0: i32, %arg1: i32, %arg2: i32) -> (i32, i32) {
    %c0_i32 = arith.constant 0 : i32
    return %arg0, %arg2 : i32, i32
  }
  func.func @transform_1(%arg0: i32, %arg1: i32, %arg2: i32) -> (i32, i32) {
    %c0_i32 = arith.constant 0 : i32
    return %arg2, %arg1 : i32, i32
  }
  func.func @transform_2(%arg0: i32, %arg1: i32, %arg2: i32) -> (i32, i32) {
    %c0_i32 = arith.constant 0 : i32
    %c0_i32_0 = arith.constant 0 : i32
    return %c0_i32, %arg1 : i32, i32
  }
  func.func @transform_3(%arg0: i32, %arg1: i32, %arg2: i32) -> (i32, i32) {
    %c0_i32 = arith.constant 0 : i32
    return %arg0, %arg1 : i32, i32
  }
}

</mosaic_0001>

<llo_original>
// kernel: tpu_custom_call.1
$region0: #{tpu_custom_call.1}
  #allocation0 [shape = 'u32[]', space=smem, size = 0x4, offset = 0x4, fixed_abs, tag = 'smem constant byte address 0x4 - core index']
  #allocation1 [shape = 'u32[72,128]{1,0:T(1,128)}', space=vmem, size = 0x9000, scoped, tag = 'internal scratch']
  #allocation2 [shape = 'f32[128,128]{1,0:T(8,128)}', space=vmem, size = 0x10000, scoped, tag = 'scratch operand']
  %s0 = inlined_call_operand.hbm [shape: bf16[128,256], index: 0, kind: input, shape index: {}]
  %s1 = inlined_call_operand.hbm [shape: bf16[256,128], index: 1, kind: input, shape index: {}]
  %s2 = inlined_call_operand.vmem [shape: f32[1,128], index: 2, kind: input, shape index: {}]
  %s3 = inlined_call_operand.hbm [shape: bf16[128,128], index: 3, kind: output, shape index: {}]
  %s4 = sld [smem:[#allocation0]]
  $region38: #{tpu_custom_call.1} parent=0
    _
  %s6 = ssub.s32 1, %s4
  %s7 = scalar_select 0, %s6, %s4
  $region1: #{tpu_custom_call.1} parent=0
    #allocation3 [shape = 'u8[65536]{0}', space=vmem, size = 0x10000, scoped, tag = 'input window, operand 0, single buffered']
    #allocation4 [shape = 's32[1]{0}', space=sflag, size = 0x4, scoped, tag = 'scoped memory for tpu_custom_call.1']
    #allocation5 [shape = 's32[1]{0}', space=sflag, size = 0x4, scoped, tag = 'scoped memory for tpu_custom_call.1']
    #allocation6 [shape = 'u8[65536]{0}', space=vmem, size = 0x10000, scoped, tag = 'input window, operand 1, single buffered']
    #allocation7 [shape = 's32[1]{0}', space=sflag, size = 0x4, scoped, tag = 'scoped memory for tpu_custom_call.1']
    #allocation8 [shape = 'u8[32768]{0}', space=vmem, size = 0x8000, scoped, tag = 'output window, operand 0, single buffered']
    %8 = vsyncpa [#allocation4], 0
    %9 = vsyncpa [#allocation7], 0
    %10 = vsyncpa [#allocation5], 0
    // Predicated region
    $region2: #{tpu_custom_call.1} parent=1 // pred_check
      _
    $region3: #{tpu_custom_call.1} parent=1 // pred_check_branch
      %12 = sbr.rel (0) target = $region5
    $region4: #{tpu_custom_call.1} parent=1 // pred_region
      %14 = vsyncadd [#allocation4], 0
      %s15 = sshll.u32 %s0, 4
      %s16 = int_to_ptr.hbm [resolvable:$true] %s15
      %s17 = sshll.u32 [#allocation3], 4
      %s18 = int_to_ptr.vmem [resolvable:$true] %s17
      %23 = dma.hbm_to_vmem [thread:$0]  %s16, 2048, %s18, [#allocation4], 128, 128, 8
    $region5: #{tpu_custom_call.1} parent=1 // pred_fallthru
      _
    // Predicated region
    $region6: #{tpu_custom_call.1} parent=1 // pred_check
      _
    $region7: #{tpu_custom_call.1} parent=1 // pred_check_branch
      %25 = sbr.rel (0) target = $region9
    $region8: #{tpu_custom_call.1} parent=1 // pred_region
      %27 = vsyncadd [#allocation7], 0
      %s28 = sshll.u32 %s1, 4
      %s29 = int_to_ptr.hbm [resolvable:$true] %s28
      %s30 = sshll.u32 [#allocation6], 4
      %s31 = int_to_ptr.vmem [resolvable:$true] %s30
      %36 = dma.hbm_to_vmem [thread:$0]  %s29, 2048, %s31, [#allocation7], 64, 64, 4
    $region9: #{tpu_custom_call.1} parent=1 // pred_fallthru
      _
    // Predicated region
    $region10: #{tpu_custom_call.1} parent=1 // pred_check
      _
    $region11: #{tpu_custom_call.1} parent=1 // pred_check_branch
      %38 = sbr.rel (0) target = $region13
    $region12: #{tpu_custom_call.1} parent=1 // pred_region
      _
    $region13: #{tpu_custom_call.1} parent=1 // pred_fallthru
      _
    // Predicated region
    $region14: #{tpu_custom_call.1} parent=1 // pred_check
      _
    $region15: #{tpu_custom_call.1} parent=1 // pred_check_branch
      %40 = sbr.rel (0) target = $region17
    $region16: #{tpu_custom_call.1} parent=1 // pred_region
      %42 = dma.done [#allocation4], 2048
    $region17: #{tpu_custom_call.1} parent=1 // pred_fallthru
      _
    // Predicated region
    $region18: #{tpu_custom_call.1} parent=1 // pred_check
      _
    $region19: #{tpu_custom_call.1} parent=1 // pred_check_branch
      %44 = sbr.rel (0) target = $region21
    $region20: #{tpu_custom_call.1} parent=1 // pred_region
      %46 = dma.done [#allocation7], 2048
    $region21: #{tpu_custom_call.1} parent=1 // pred_fallthru
      _
    %p47 = scmp.eq.s32.totalorder 0, 0
    // Predicated region
    $region22: #{tpu_custom_call.1} parent=1 // pred_check
      %p48 = pneg %p47
    $region23: #{tpu_custom_call.1} parent=1 // pred_check_branch
      %50 = sbr.rel (%p48) target = $region25
    $region24: #{tpu_custom_call.1} parent=1 // pred_region
      %51 = vst [vmem:[#allocation2] sm:$0xff] 0.0
      %52 = vst [vmem:[#allocation2 + $0x8] sm:$0xff] 0.0
      %53 = vst [vmem:[#allocation2 + $0x10] sm:$0xff] 0.0
      %54 = vst [vmem:[#allocation2 + $0x18] sm:$0xff] 0.0
      %55 = vst [vmem:[#allocation2 + $0x20] sm:$0xff] 0.0
      %56 = vst [vmem:[#allocation2 + $0x28] sm:$0xff] 0.0
      %57 = vst [vmem:[#allocation2 + $0x30] sm:$0xff] 0.0
      %58 = vst [vmem:[#allocation2 + $0x38] sm:$0xff] 0.0
      %59 = vst [vmem:[#allocation2 + $0x40] sm:$0xff] 0.0
      %60 = vst [vmem:[#allocation2 + $0x48] sm:$0xff] 0.0
      %61 = vst [vmem:[#allocation2 + $0x50] sm:$0xff] 0.0
      %62 = vst [vmem:[#allocation2 + $0x58] sm:$0xff] 0.0
      %63 = vst [vmem:[#allocation2 + $0x60] sm:$0xff] 0.0
      %64 = vst [vmem:[#allocation2 + $0x68] sm:$0xff] 0.0
      %65 = vst [vmem:[#allocation2 + $0x70] sm:$0xff] 0.0
      %66 = vst [vmem:[#allocation2 + $0x78] sm:$0xff] 0.0
    $region25: #{tpu_custom_call.1} parent=1 // pred_fallthru
      _
    %v67 = vld [vmem:[#allocation2] sm:$0xff]
    %v68 = vld [vmem:[#allocation2 + $0x8] sm:$0xff]
    %v69 = vld [vmem:[#allocation2 + $0x10] sm:$0xff]
    %v70 = vld [vmem:[#allocation2 + $0x18] sm:$0xff]
    %v71 = vld [vmem:[#allocation2 + $0x20] sm:$0xff]
    %v72 = vld [vmem:[#allocation2 + $0x28] sm:$0xff]
    %v73 = vld [vmem:[#allocation2 + $0x30] sm:$0xff]
    %v74 = vld [vmem:[#allocation2 + $0x38] sm:$0xff]
    %v75 = vld [vmem:[#allocation2 + $0x40] sm:$0xff]
    %v76 = vld [vmem:[#allocation2 + $0x48] sm:$0xff]
    %v77 = vld [vmem:[#allocation2 + $0x50] sm:$0xff]
    %v78 = vld [vmem:[#allocation2 + $0x58] sm:$0xff]
    %v79 = vld [vmem:[#allocation2 + $0x60] sm:$0xff]
    %v80 = vld [vmem:[#allocation2 + $0x68] sm:$0xff]
    %v81 = vld [vmem:[#allocation2 + $0x70] sm:$0xff]
    %v82 = vld [vmem:[#allocation2 + $0x78] sm:$0xff]
    %v83 = vld [vmem:[#allocation3] sm:$0xff]
    %v84 = vld [vmem:[#allocation3 + $0x8] sm:$0xff]
    %v85 = vld [vmem:[#allocation3 + $0x10] sm:$0xff]
    %v86 = vld [vmem:[#allocation3 + $0x18] sm:$0xff]
    %v87 = vld [vmem:[#allocation3 + $0x20] sm:$0xff]
    %v88 = vld [vmem:[#allocation3 + $0x28] sm:$0xff]
    %v89 = vld [vmem:[#allocation3 + $0x30] sm:$0xff]
    %v90 = vld [vmem:[#allocation3 + $0x38] sm:$0xff]
    %v91 = vld [vmem:[#allocation3 + $0x40] sm:$0xff]
    %v92 = vld [vmem:[#allocation3 + $0x48] sm:$0xff]
    %v93 = vld [vmem:[#allocation3 + $0x50] sm:$0xff]
    %v94 = vld [vmem:[#allocation3 + $0x58] sm:$0xff]
    %v95 = vld [vmem:[#allocation3 + $0x60] sm:$0xff]
    %v96 = vld [vmem:[#allocation3 + $0x68] sm:$0xff]
    %v97 = vld [vmem:[#allocation3 + $0x70] sm:$0xff]
    %v98 = vld [vmem:[#allocation3 + $0x78] sm:$0xff]
    %v99 = vld [vmem:[#allocation6] sm:$0xf]
    %v100 = vld [vmem:[#allocation6 + $0x4] sm:$0xf]
    %v101 = vld [vmem:[#allocation6 + $0x8] sm:$0xf]
    %v102 = vld [vmem:[#allocation6 + $0xc] sm:$0xf]
    %v103 = vld [vmem:[#allocation6 + $0x10] sm:$0xf]
    %v104 = vld [vmem:[#allocation6 + $0x14] sm:$0xf]
    %v105 = vld [vmem:[#allocation6 + $0x18] sm:$0xf]
    %v106 = vld [vmem:[#allocation6 + $0x1c] sm:$0xf]
    %v107 = vld [vmem:[#allocation6 + $0x20] sm:$0xf]
    %v108 = vld [vmem:[#allocation6 + $0x24] sm:$0xf]
    %v109 = vld [vmem:[#allocation6 + $0x28] sm:$0xf]
    %v110 = vld [vmem:[#allocation6 + $0x2c] sm:$0xf]
    %v111 = vld [vmem:[#allocation6 + $0x30] sm:$0xf]
    %v112 = vld [vmem:[#allocation6 + $0x34] sm:$0xf]
    %v113 = vld [vmem:[#allocation6 + $0x38] sm:$0xf]
    %v114 = vld [vmem:[#allocation6 + $0x3c] sm:$0xf]
    %v115 = vld [vmem:[#allocation6 + $0x40] sm:$0xf]
    %v116 = vld [vmem:[#allocation6 + $0x44] sm:$0xf]
    %v117 = vld [vmem:[#allocation6 + $0x48] sm:$0xf]
    %v118 = vld [vmem:[#allocation6 + $0x4c] sm:$0xf]
    %v119 = vld [vmem:[#allocation6 + $0x50] sm:$0xf]
    %v120 = vld [vmem:[#allocation6 + $0x54] sm:$0xf]
    %v121 = vld [vmem:[#allocation6 + $0x58] sm:$0xf]
    %v122 = vld [vmem:[#allocation6 + $0x5c] sm:$0xf]
    %v123 = vld [vmem:[#allocation6 + $0x60] sm:$0xf]
    %v124 = vld [vmem:[#allocation6 + $0x64] sm:$0xf]
    %v125 = vld [vmem:[#allocation6 + $0x68] sm:$0xf]
    %v126 = vld [vmem:[#allocation6 + $0x6c] sm:$0xf]
    %v127 = vld [vmem:[#allocation6 + $0x70] sm:$0xf]
    %v128 = vld [vmem:[#allocation6 + $0x74] sm:$0xf]
    %v129 = vld [vmem:[#allocation6 + $0x78] sm:$0xf]
    %v130 = vld [vmem:[#allocation6 + $0x7c] sm:$0xf]
    %v147 = vunpack.c.l.b16 %v83
    %v148 = vunpack.c.h.b16 %v83
    %v149 = vunpack.c.l.b16 %v84
    %v150 = vunpack.c.h.b16 %v84
    %v151 = vunpack.c.l.b16 %v85
    %v152 = vunpack.c.h.b16 %v85
    %v153 = vunpack.c.l.b16 %v86
    %v154 = vunpack.c.h.b16 %v86
    %v155 = vunpack.c.l.b16 %v87
    %v156 = vunpack.c.h.b16 %v87
    %v157 = vunpack.c.l.b16 %v88
    %v158 = vunpack.c.h.b16 %v88
    %v159 = vunpack.c.l.b16 %v89
    %v160 = vunpack.c.h.b16 %v89
    %v161 = vunpack.c.l.b16 %v90
    %v162 = vunpack.c.h.b16 %v90
    %v163 = vunpack.c.l.b16 %v91
    %v164 = vunpack.c.h.b16 %v91
    %v165 = vunpack.c.l.b16 %v92
    %v166 = vunpack.c.h.b16 %v92
    %v167 = vunpack.c.l.b16 %v93
    %v168 = vunpack.c.h.b16 %v93
    %v169 = vunpack.c.l.b16 %v94
    %v170 = vunpack.c.h.b16 %v94
    %v171 = vunpack.c.l.b16 %v95
    %v172 = vunpack.c.h.b16 %v95
    %v173 = vunpack.c.l.b16 %v96
    %v174 = vunpack.c.h.b16 %v96
    %v175 = vunpack.c.l.b16 %v97
    %v176 = vunpack.c.h.b16 %v97
    %v177 = vunpack.c.l.b16 %v98
    %v178 = vunpack.c.h.b16 %v98
    %v179 = vpack.c.b16 %v149, %v147
    %v180 = vpack.c.b16 %v150, %v148
    %v181 = vpack.c.b16 %v153, %v151
    %v182 = vpack.c.b16 %v154, %v152
    %v183 = vpack.c.b16 %v157, %v155
    %v184 = vpack.c.b16 %v158, %v156
    %v185 = vpack.c.b16 %v161, %v159
    %v186 = vpack.c.b16 %v162, %v160
    %v187 = vpack.c.b16 %v165, %v163
    %v188 = vpack.c.b16 %v166, %v164
    %v189 = vpack.c.b16 %v169, %v167
    %v190 = vpack.c.b16 %v170, %v168
    %v191 = vpack.c.b16 %v173, %v171
    %v192 = vpack.c.b16 %v174, %v172
    %v193 = vpack.c.b16 %v177, %v175
    %v194 = vpack.c.b16 %v178, %v176
    %v243 = vunpack.c.l.b16 %v99
    %v244 = vunpack.c.l.b16 %v100
    %v245 = vunpack.c.l.b16 %v101
    %v246 = vunpack.c.l.b16 %v102
    %v247 = vunpack.c.l.b16 %v103
    %v248 = vunpack.c.l.b16 %v104
    %v249 = vunpack.c.l.b16 %v105
    %v250 = vunpack.c.l.b16 %v106
    %v251 = vunpack.c.l.b16 %v107
    %v252 = vunpack.c.l.b16 %v108
    %v253 = vunpack.c.l.b16 %v109
    %v254 = vunpack.c.l.b16 %v110
    %v255 = vunpack.c.l.b16 %v111
    %v256 = vunpack.c.l.b16 %v112
    %v257 = vunpack.c.l.b16 %v113
    %v258 = vunpack.c.l.b16 %v114
    %v259 = vunpack.c.l.b16 %v115
    %v260 = vunpack.c.l.b16 %v116
    %v261 = vunpack.c.l.b16 %v117
    %v262 = vunpack.c.l.b16 %v118
    %v263 = vunpack.c.l.b16 %v119
    %v264 = vunpack.c.l.b16 %v120
    %v265 = vunpack.c.l.b16 %v121
    %v266 = vunpack.c.l.b16 %v122
    %v267 = vunpack.c.l.b16 %v123
    %v268 = vunpack.c.l.b16 %v124
    %v269 = vunpack.c.l.b16 %v125
    %v270 = vunpack.c.l.b16 %v126
    %v271 = vunpack.c.l.b16 %v127
    %v272 = vunpack.c.l.b16 %v128
    %v273 = vunpack.c.l.b16 %v129
    %v274 = vunpack.c.l.b16 %v130
    %v275 = vpack.c.b16 %v244, %v243
    %v276 = vpack.c.b16 %v246, %v245
    %v277 = vpack.c.b16 %v248, %v247
    %v278 = vpack.c.b16 %v250, %v249
    %v279 = vpack.c.b16 %v252, %v251
    %v280 = vpack.c.b16 %v254, %v253
    %v281 = vpack.c.b16 %v256, %v255
    %v282 = vpack.c.b16 %v258, %v257
    %v283 = vpack.c.b16 %v260, %v259
    %v284 = vpack.c.b16 %v262, %v261
    %v285 = vpack.c.b16 %v264, %v263
    %v286 = vpack.c.b16 %v266, %v265
    %v287 = vpack.c.b16 %v268, %v267
    %v288 = vpack.c.b16 %v270, %v269
    %v289 = vpack.c.b16 %v272, %v271
    %v290 = vpack.c.b16 %v274, %v273
    %307 = vmatpush.bf16.msra.mxu0 %v282
    %308 = vmatpush.bf16.msra.mxu0 %v281
    %309 = vmatpush.bf16.msra.mxu0 %v280
    %310 = vmatpush.bf16.msra.mxu0 %v279
    %311 = vmatpush.bf16.msra.mxu0 %v278
    %312 = vmatpush.bf16.msra.mxu0 %v277
    %313 = vmatpush.bf16.msra.mxu0 %v276
    %314 = vmatpush.bf16.msra.mxu0 %v275
    %315 = vmatmul.bf16.gmra.mxu0 %v179
    %v316 = vpop.f32.mrf.mxu0
    %v317 = vadd.f32 0.0, %v316
    %v318 = vpop.f32.mrf.mxu0
    %v319 = vadd.f32 0.0, %v318
    %320 = vmatmul.bf16.gmra.mxu0 %v181
    %v321 = vpop.f32.mrf.mxu0
    %v322 = vadd.f32 0.0, %v321
    %v323 = vpop.f32.mrf.mxu0
    %v324 = vadd.f32 0.0, %v323
    %325 = vmatmul.bf16.gmra.mxu0 %v183
    %v326 = vpop.f32.mrf.mxu0
    %v327 = vadd.f32 0.0, %v326
    %v328 = vpop.f32.mrf.mxu0
    %v329 = vadd.f32 0.0, %v328
    %330 = vmatmul.bf16.gmra.mxu0 %v185
    %v331 = vpop.f32.mrf.mxu0
    %v332 = vadd.f32 0.0, %v331
    %v333 = vpop.f32.mrf.mxu0
    %v334 = vadd.f32 0.0, %v333
    %335 = vmatmul.bf16.gmra.mxu0 %v187
    %v336 = vpop.f32.mrf.mxu0
    %v337 = vadd.f32 0.0, %v336
    %v338 = vpop.f32.mrf.mxu0
    %v339 = vadd.f32 0.0, %v338
    %340 = vmatmul.bf16.gmra.mxu0 %v189
    %v341 = vpop.f32.mrf.mxu0
    %v342 = vadd.f32 0.0, %v341
    %v343 = vpop.f32.mrf.mxu0
    %v344 = vadd.f32 0.0, %v343
    %345 = vmatmul.bf16.gmra.mxu0 %v191
    %v346 = vpop.f32.mrf.mxu0
    %v347 = vadd.f32 0.0, %v346
    %v348 = vpop.f32.mrf.mxu0
    %v349 = vadd.f32 0.0, %v348
    %350 = vmatmul.bf16.gmra.mxu0 %v193
    %v351 = vpop.f32.mrf.mxu0
    %v352 = vadd.f32 0.0, %v351
    %v353 = vpop.f32.mrf.mxu0
    %v354 = vadd.f32 0.0, %v353
    %355 = vdwg.mxu0
    %356 = vmatpush.bf16.msra.mxu0 %v290
    %357 = vmatpush.bf16.msra.mxu0 %v289
    %358 = vmatpush.bf16.msra.mxu0 %v288
    %359 = vmatpush.bf16.msra.mxu0 %v287
    %360 = vmatpush.bf16.msra.mxu0 %v286
    %361 = vmatpush.bf16.msra.mxu0 %v285
    %362 = vmatpush.bf16.msra.mxu0 %v284
    %363 = vmatpush.bf16.msra.mxu0 %v283
    %364 = vmatmul.bf16.gmra.mxu0 %v180
    %v365 = vpop.f32.mrf.mxu0
    %v366 = vadd.f32 %v317, %v365
    %v367 = vpop.f32.mrf.mxu0
    %v368 = vadd.f32 %v319, %v367
    %369 = vmatmul.bf16.gmra.mxu0 %v182
    %v370 = vpop.f32.mrf.mxu0
    %v371 = vadd.f32 %v322, %v370
    %v372 = vpop.f32.mrf.mxu0
    %v373 = vadd.f32 %v324, %v372
    %374 = vmatmul.bf16.gmra.mxu0 %v184
    %v375 = vpop.f32.mrf.mxu0
    %v376 = vadd.f32 %v327, %v375
    %v377 = vpop.f32.mrf.mxu0
    %v378 = vadd.f32 %v329, %v377
    %379 = vmatmul.bf16.gmra.mxu0 %v186
    %v380 = vpop.f32.mrf.mxu0
    %v381 = vadd.f32 %v332, %v380
    %v382 = vpop.f32.mrf.mxu0
    %v383 = vadd.f32 %v334, %v382
    %384 = vmatmul.bf16.gmra.mxu0 %v188
    %v385 = vpop.f32.mrf.mxu0
    %v386 = vadd.f32 %v337, %v385
    %v387 = vpop.f32.mrf.mxu0
    %v388 = vadd.f32 %v339, %v387
    %389 = vmatmul.bf16.gmra.mxu0 %v190
    %v390 = vpop.f32.mrf.mxu0
    %v391 = vadd.f32 %v342, %v390
    %v392 = vpop.f32.mrf.mxu0
    %v393 = vadd.f32 %v344, %v392
    %394 = vmatmul.bf16.gmra.mxu0 %v192
    %v395 = vpop.f32.mrf.mxu0
    %v396 = vadd.f32 %v347, %v395
    %v397 = vpop.f32.mrf.mxu0
    %v398 = vadd.f32 %v349, %v397
    %399 = vmatmul.bf16.gmra.mxu0 %v194
    %v400 = vpop.f32.mrf.mxu0
    %v401 = vadd.f32 %v352, %v400
    %v402 = vpop.f32.mrf.mxu0
    %v403 = vadd.f32 %v354, %v402
    %404 = vdwg.mxu0
    %v405 = vadd.f32 %v67, %v366
    %v406 = vadd.f32 %v68, %v368
    %v407 = vadd.f32 %v69, %v371
    %v408 = vadd.f32 %v70, %v373
    %v409 = vadd.f32 %v71, %v376
    %v410 = vadd.f32 %v72, %v378
    %v411 = vadd.f32 %v73, %v381
    %v412 = vadd.f32 %v74, %v383
    %v413 = vadd.f32 %v75, %v386
    %v414 = vadd.f32 %v76, %v388
    %v415 = vadd.f32 %v77, %v391
    %v416 = vadd.f32 %v78, %v393
    %v417 = vadd.f32 %v79, %v396
    %v418 = vadd.f32 %v80, %v398
    %v419 = vadd.f32 %v81, %v401
    %v420 = vadd.f32 %v82, %v403
    %421 = vst [vmem:[#allocation2] sm:$0xff] %v405
    %422 = vst [vmem:[#allocation2 + $0x8] sm:$0xff] %v406
    %423 = vst [vmem:[#allocation2 + $0x10] sm:$0xff] %v407
    %424 = vst [vmem:[#allocation2 + $0x18] sm:$0xff] %v408
    %425 = vst [vmem:[#allocation2 + $0x20] sm:$0xff] %v409
    %426 = vst [vmem:[#allocation2 + $0x28] sm:$0xff] %v410
    %427 = vst [vmem:[#allocation2 + $0x30] sm:$0xff] %v411
    %428 = vst [vmem:[#allocation2 + $0x38] sm:$0xff] %v412
    %429 = vst [vmem:[#allocation2 + $0x40] sm:$0xff] %v413
    %430 = vst [vmem:[#allocation2 + $0x48] sm:$0xff] %v414
    %431 = vst [vmem:[#allocation2 + $0x50] sm:$0xff] %v415
    %432 = vst [vmem:[#allocation2 + $0x58] sm:$0xff] %v416
    %433 = vst [vmem:[#allocation2 + $0x60] sm:$0xff] %v417
    %434 = vst [vmem:[#allocation2 + $0x68] sm:$0xff] %v418
    %435 = vst [vmem:[#allocation2 + $0x70] sm:$0xff] %v419
    %436 = vst [vmem:[#allocation2 + $0x78] sm:$0xff] %v420
    // Predicated region
    $region26: #{tpu_custom_call.1} parent=1 // pred_check
      %p437 = pneg %p47
    $region27: #{tpu_custom_call.1} parent=1 // pred_check_branch
      %439 = sbr.rel (%p437) target = $region29
    $region28: #{tpu_custom_call.1} parent=1 // pred_region
      %v440 = vld [vmem:[#allocation2] sm:$0xff]
      %v441 = vld [vmem:[#allocation2 + $0x8] sm:$0xff]
      %v442 = vld [vmem:[#allocation2 + $0x10] sm:$0xff]
      %v443 = vld [vmem:[#allocation2 + $0x18] sm:$0xff]
      %v444 = vld [vmem:[#allocation2 + $0x20] sm:$0xff]
      %v445 = vld [vmem:[#allocation2 + $0x28] sm:$0xff]
      %v446 = vld [vmem:[#allocation2 + $0x30] sm:$0xff]
      %v447 = vld [vmem:[#allocation2 + $0x38] sm:$0xff]
      %v448 = vld [vmem:[#allocation2 + $0x40] sm:$0xff]
      %v449 = vld [vmem:[#allocation2 + $0x48] sm:$0xff]
      %v450 = vld [vmem:[#allocation2 + $0x50] sm:$0xff]
      %v451 = vld [vmem:[#allocation2 + $0x58] sm:$0xff]
      %v452 = vld [vmem:[#allocation2 + $0x60] sm:$0xff]
      %v453 = vld [vmem:[#allocation2 + $0x68] sm:$0xff]
      %v454 = vld [vmem:[#allocation2 + $0x70] sm:$0xff]
      %v455 = vld [vmem:[#allocation2 + $0x78] sm:$0xff]
      %v456 = vld [vmem:[%s2] sm:$0x1]
      %v458 = vperm.slane %v456, 0
      %v460 = vadd.f32 %v440, %v458
      %v461 = vadd.f32 %v441, %v458
      %v462 = vadd.f32 %v442, %v458
      %v463 = vadd.f32 %v443, %v458
      %v464 = vadd.f32 %v444, %v458
      %v465 = vadd.f32 %v445, %v458
      %v466 = vadd.f32 %v446, %v458
      %v467 = vadd.f32 %v447, %v458
      %v468 = vadd.f32 %v448, %v458
      %v469 = vadd.f32 %v449, %v458
      %v470 = vadd.f32 %v450, %v458
      %v471 = vadd.f32 %v451, %v458
      %v472 = vadd.f32 %v452, %v458
      %v473 = vadd.f32 %v453, %v458
      %v474 = vadd.f32 %v454, %v458
      %v475 = vadd.f32 %v455, %v458
      %v476 = vpack.c.bf16 %v460, %v460
      %v477 = vpack.c.bf16 %v461, %v461
      %v478 = vpack.c.bf16 %v462, %v462
      %v479 = vpack.c.bf16 %v463, %v463
      %v480 = vpack.c.bf16 %v464, %v464
      %v481 = vpack.c.bf16 %v465, %v465
      %v482 = vpack.c.bf16 %v466, %v466
      %v483 = vpack.c.bf16 %v467, %v467
      %v484 = vpack.c.bf16 %v468, %v468
      %v485 = vpack.c.bf16 %v469, %v469
      %v486 = vpack.c.bf16 %v470, %v470
      %v487 = vpack.c.bf16 %v471, %v471
      %v488 = vpack.c.bf16 %v472, %v472
      %v489 = vpack.c.bf16 %v473, %v473
      %v490 = vpack.c.bf16 %v474, %v474
      %v491 = vpack.c.bf16 %v475, %v475
      %492 = vst [vmem:[#allocation8] sm:$0xf] %v476
      %493 = vst [vmem:[#allocation8 + $0x4] sm:$0xf] %v477
      %494 = vst [vmem:[#allocation8 + $0x8] sm:$0xf] %v478
      %495 = vst [vmem:[#allocation8 + $0xc] sm:$0xf] %v479
      %496 = vst [vmem:[#allocation8 + $0x10] sm:$0xf] %v480
      %497 = vst [vmem:[#allocation8 + $0x14] sm:$0xf] %v481
      %498 = vst [vmem:[#allocation8 + $0x18] sm:$0xf] %v482
      %499 = vst [vmem:[#allocation8 + $0x1c] sm:$0xf] %v483
      %500 = vst [vmem:[#allocation8 + $0x20] sm:$0xf] %v484
      %501 = vst [vmem:[#allocation8 + $0x24] sm:$0xf] %v485
      %502 = vst [vmem:[#allocation8 + $0x28] sm:$0xf] %v486
      %503 = vst [vmem:[#allocation8 + $0x2c] sm:$0xf] %v487
      %504 = vst [vmem:[#allocation8 + $0x30] sm:$0xf] %v488
      %505 = vst [vmem:[#allocation8 + $0x34] sm:$0xf] %v489
      %506 = vst [vmem:[#allocation8 + $0x38] sm:$0xf] %v490
      %507 = vst [vmem:[#allocation8 + $0x3c] sm:$0xf] %v491
    $region29: #{tpu_custom_call.1} parent=1 // pred_fallthru
      _
    // Predicated region
    $region30: #{tpu_custom_call.1} parent=1 // pred_check
      _
    $region31: #{tpu_custom_call.1} parent=1 // pred_check_branch
      %509 = sbr.rel (0) target = $region33
    $region32: #{tpu_custom_call.1} parent=1 // pred_region
      %511 = vsyncadd [#allocation5], 0
      %s512 = sshll.u32 [#allocation8], 4
      %s513 = int_to_ptr.vmem [resolvable:$true] %s512
      %s514 = sshll.u32 %s3, 4
      %s515 = int_to_ptr.hbm [resolvable:$true] %s514
      %520 = dma.vmem_to_hbm [thread:$0]  %s513, 1024, %s515, [#allocation5], 64, 64, 4
    $region33: #{tpu_custom_call.1} parent=1 // pred_fallthru
      _
    // Predicated region
    $region34: #{tpu_custom_call.1} parent=1 // pred_check
      _
    $region35: #{tpu_custom_call.1} parent=1 // pred_check_branch
      %522 = sbr.rel (0) target = $region37
    $region36: #{tpu_custom_call.1} parent=1 // pred_region
      %524 = dma.done [#allocation5], 1024
    $region37: #{tpu_custom_call.1} parent=1 // pred_fallthru
      _
    %525 = vsyncpa [#allocation4], 1
    %526 = vsyncpa [#allocation7], 1
    %527 = vsyncpa [#allocation5], 1

</llo_original>
